<compile_context>
chip_gen: v5e
topology: v5e:2x2
jax: 0.10.0
libtpu: 0.0.40
codegen_flags: <defaults>
</compile_context>

<pallas_src>
import functools

import jax
import jax.numpy as jnp
from jax.experimental import pallas as pl
from jax.experimental.pallas import tpu as pltpu


def _round_up(x, m):
    return ((x + m - 1) // m) * m


def gaussian_merge_kernel(z_ref, w_ref, b_ref, mu1_ref, lv1_ref, eps_ref,
                          zout_ref, mu_ref, lv_ref):
    out_p = mu_ref.shape[-1]

    # ---- one fused matmul for both linear heads (bf16 operands, f32 acc) ----
    z = z_ref[...].astype(jnp.bfloat16)
    w = w_ref[...].astype(jnp.bfloat16)
    lin = jnp.dot(z, w, preferred_element_type=jnp.float32) + b_ref[...]
    mu2 = lin[:, :out_p]            # Linear_mu(z)
    lv2_lin = lin[:, out_p:]        # Linear_log_var(z), pre-softplus

    # precision2 = 1 / exp(softplus(lv2_lin)) = 1 / (1 + exp(lv2_lin))
    precision2 = pl.reciprocal(1.0 + jnp.exp(lv2_lin))
    precision1 = jnp.exp(-lv1_ref[...])

    # ---- precision-weighted merge ----
    denom = precision1 + precision2
    inv_denom = pl.reciprocal(denom)                       # reused for mu and var
    mu = (mu1_ref[...] * precision1 + mu2 * precision2) * inv_denom
    var_eps = inv_denom + 1e-8                             # var = 1/denom
    log_var = jnp.log(var_eps)
    std = jnp.sqrt(var_eps)                                # == exp(0.5*log(var+1e-8))

    # ---- reparametrize: z = mu + std * eps ----
    zout_ref[...] = (mu + std * eps_ref[...]).astype(zout_ref.dtype)
    mu_ref[...] = mu.astype(mu_ref.dtype)
    lv_ref[...] = log_var.astype(lv_ref.dtype)


@functools.partial(jax.jit, static_argnames=("tm_max",))
def gaussian_merge(z, mu1, log_var1, w_mu, b_mu, w_lv, b_lv, eps, *, tm_max=512):
    """z: (B, IN); mu1, log_var1, eps: (B, OUT); w_*: (IN, OUT); b_*: (OUT,) or (1, OUT)."""
    B, IN = z.shape
    OUT = w_mu.shape[1]

    # Lane-dense padding of the feature axis (multiple of 128).
    OUT_P = _round_up(OUT, 128)

    # Fuse (and pad) the two heads into one (IN, 2*OUT_P) weight / (1, 2*OUT_P) bias.
    w = jnp.zeros((IN, 2 * OUT_P), jnp.float32)
    w = w.at[:, :OUT].set(w_mu).at[:, OUT_P:OUT_P + OUT].set(w_lv)
    b = jnp.zeros((1, 2 * OUT_P), jnp.float32)
    b = b.at[:, :OUT].set(b_mu.reshape(1, OUT)).at[:, OUT_P:OUT_P + OUT].set(b_lv.reshape(1, OUT))

    # Batch tiling: TM rows per grid step (sublane-aligned), batch padded to a
    # multiple of TM. Keep TM modest enough that double-buffered tiles fit the
    # 32 MiB scoped-VMEM default on v7x (64 MiB physical); raise vmem_limit_bytes
    # via CompilerParams if sweeping larger TM on v6e.
    TM = min(tm_max, _round_up(B, 8))
    B_P = _round_up(B, TM)

    def pad2(x, rows, cols):
        return jnp.pad(x, ((0, rows - x.shape[0]), (0, cols - x.shape[1])))

    z_p = pad2(z.astype(jnp.float32), B_P, IN)
    mu1_p = pad2(mu1.astype(jnp.float32), B_P, OUT_P)
    lv1_p = pad2(log_var1.astype(jnp.float32), B_P, OUT_P)
    eps_p = pad2(eps.astype(jnp.float32), B_P, OUT_P)

    grid = (B_P // TM,)
    row_spec = lambda cols: pl.BlockSpec((TM, cols), lambda i: (i, 0))
    resident = lambda shape: pl.BlockSpec(shape, lambda i: (0, 0))

    out_shape = (
        jax.ShapeDtypeStruct((B_P, OUT_P), jnp.float32),   # sample
        jax.ShapeDtypeStruct((B_P, OUT_P), jnp.float32),   # mu
        jax.ShapeDtypeStruct((B_P, OUT_P), jnp.float32),   # log_var
    )

    sample_p, mu_p, lv_p = pl.pallas_call(
        gaussian_merge_kernel,
        out_shape=out_shape,
        grid=grid,
        in_specs=[
            row_spec(IN),                       # z tile
            resident((IN, 2 * OUT_P)),          # fused weight (stays resident)
            resident((1, 2 * OUT_P)),           # fused bias
            row_spec(OUT_P),                    # mu1 tile
            row_spec(OUT_P),                    # log_var1 tile
            row_spec(OUT_P),                    # eps tile
        ],
        out_specs=(row_spec(OUT_P), row_spec(OUT_P), row_spec(OUT_P)),
        compiler_params=pltpu.CompilerParams(dimension_semantics=("parallel",)),
    )(z_p, w, b, mu1_p, lv1_p, eps_p)

    return sample_p[:B, :OUT], mu_p[:B, :OUT], lv_p[:B, :OUT]


def _reference(z, mu1, log_var1, w_mu, b_mu, w_lv, b_lv, eps):
    # Original torch math; matmul operands in bf16 (f32 accumulation) to mirror
    # the kernel's MXU precision policy. Elementwise path is the exact
    # softplus / exp / divide formulation from the PyTorch module.
    zb = z.astype(jnp.bfloat16)
    mu2 = jnp.dot(zb, w_mu.astype(jnp.bfloat16),
                  preferred_element_type=jnp.float32) + b_mu
    log_var2 = jnp.logaddexp(jnp.dot(zb, w_lv.astype(jnp.bfloat16),
                                     preferred_element_type=jnp.float32) + b_lv, 0.0)
    p1 = 1.0 / jnp.exp(log_var1)
    p2 = 1.0 / jnp.exp(log_var2)
    mu = (mu1 * p1 + mu2 * p2) / (p1 + p2)
    var = 1.0 / (p1 + p2)
    log_var = jnp.log(var + 1e-8)
    sample = mu + jnp.exp(0.5 * log_var) * eps
    return sample, mu, log_var


if __name__ == "__main__":
    key = jax.random.PRNGKey(0)
    B, IN_FEATURES, OUT_FEATURES = 8, 32, 16

    k = jax.random.split(key, 8)
    # Deterministic parameter init (nn.Linear-style uniform bounds),
    # weights stored pre-transposed as (in_features, out_features).
    bound = 1.0 / jnp.sqrt(IN_FEATURES)
    w_mu = jax.random.uniform(k[0], (IN_FEATURES, OUT_FEATURES), jnp.float32, -bound, bound)
    b_mu = jax.random.uniform(k[1], (1, OUT_FEATURES), jnp.float32, -bound, bound)
    w_lv = jax.random.uniform(k[2], (IN_FEATURES, OUT_FEATURES), jnp.float32, -bound, bound)
    b_lv = jax.random.uniform(k[3], (1, OUT_FEATURES), jnp.float32, -bound, bound)

    # Inputs: latent z, plus mean / log-variance of the first Gaussian.
    z_in = jax.random.normal(k[4], (B, IN_FEATURES), jnp.float32)
    mu1 = jax.random.normal(k[5], (B, OUT_FEATURES), jnp.float32)
    log_var1 = jax.random.normal(k[6], (B, OUT_FEATURES), jnp.float32) * 0.5
    # Reparametrization noise (torch.randn equivalent), precomputed for determinism.
    # TODO(synk): in-kernel pltpu.prng_* sampling could replace the explicit eps input.
    eps = jax.random.normal(k[7], (B, OUT_FEATURES), jnp.float32)

    sample, mu, log_var = gaussian_merge(z_in, mu1, log_var1, w_mu, b_mu, w_lv, b_lv, eps)
    jax.block_until_ready((sample, mu, log_var))

    ref_sample, ref_mu, ref_lv = _reference(z_in, mu1, log_var1, w_mu, b_mu, w_lv, b_lv, eps)
    assert jnp.allclose(sample, ref_sample, atol=1e-5, rtol=1e-5)
    assert jnp.allclose(mu, ref_mu, atol=1e-5, rtol=1e-5)
    assert jnp.allclose(log_var, ref_lv, atol=1e-5, rtol=1e-5)

    print("KERNEL_OK")
</pallas_src>

<mosaic_0001>
module attributes {stable_mosaic.version = 11 : i64} {
  func.func @gaussian_merge_kernel(%arg0: i32, %arg1: memref<8x32xf32, #tpu.memory_space<vmem>>, %arg2: memref<32x256xf32, #tpu.memory_space<vmem>>, %arg3: memref<1x256xf32, #tpu.memory_space<vmem>>, %arg4: memref<8x128xf32, #tpu.memory_space<vmem>>, %arg5: memref<8x128xf32, #tpu.memory_space<vmem>>, %arg6: memref<8x128xf32, #tpu.memory_space<vmem>>, %arg7: memref<8x128xf32, #tpu.memory_space<vmem>>, %arg8: memref<8x128xf32, #tpu.memory_space<vmem>>, %arg9: memref<8x128xf32, #tpu.memory_space<vmem>>) attributes {dimension_semantics = [#tpu.dimension_semantics<parallel>], iteration_bounds = array<i64: 1>, scalar_prefetch = 0 : i64, scratch_operands = 0 : i64, tpu.core_type = #tpu.core_type<tc>, window_params = [{transform_indices = @transform_0, window_bounds = array<i64: 8, 32>}, {pipeline_mode = #tpu.pipeline_mode<synchronous>, transform_indices = @transform_1, window_bounds = array<i64: 32, 256>}, {pipeline_mode = #tpu.pipeline_mode<synchronous>, transform_indices = @transform_2, window_bounds = array<i64: 1, 256>}, {transform_indices = @transform_3, window_bounds = array<i64: 8, 128>}, {transform_indices = @transform_4, window_bounds = array<i64: 8, 128>}, {transform_indices = @transform_5, window_bounds = array<i64: 8, 128>}, {transform_indices = @transform_6, window_bounds = array<i64: 8, 128>}, {transform_indices = @transform_7, window_bounds = array<i64: 8, 128>}, {transform_indices = @transform_8, window_bounds = array<i64: 8, 128>}]} {
    %c0 = arith.constant 0 : index
    %c0_0 = arith.constant 0 : index
    %0 = vector.load %arg1[%c0, %c0_0] : memref<8x32xf32, #tpu.memory_space<vmem>>, vector<8x32xf32>
    %1 = arith.truncf %0 : vector<8x32xf32> to vector<8x32xbf16>
    %c0_1 = arith.constant 0 : index
    %c0_2 = arith.constant 0 : index
    %2 = vector.load %arg2[%c0_1, %c0_2] : memref<32x256xf32, #tpu.memory_space<vmem>>, vector<32x256xf32>
    %3 = arith.truncf %2 : vector<32x256xf32> to vector<32x256xbf16>
    %cst = arith.constant dense<0.000000e+00> : vector<8x256xf32>
    %4 = tpu.matmul %1, %3, %cst {dimension_numbers = #tpu.dot_dimension_numbers<[1], [0], [0], [1], [0, 0, 1, 1], [], []>} : vector<8x32xbf16>, vector<32x256xbf16>, vector<8x256xf32> -> vector<8x256xf32>
    %c0_3 = arith.constant 0 : index
    %c0_4 = arith.constant 0 : index
    %5 = vector.load %arg3[%c0_3, %c0_4] : memref<1x256xf32, #tpu.memory_space<vmem>>, vector<1x256xf32>
    %6 = vector.broadcast %5 : vector<1x256xf32> to vector<8x256xf32>
    %7 = arith.addf %4, %6 : vector<8x256xf32>
    %8 = vector.extract_strided_slice %7 {offsets = [0, 0], sizes = [8, 128], strides = [1, 1]} : vector<8x256xf32> to vector<8x128xf32>
    %9 = vector.extract_strided_slice %7 {offsets = [0, 128], sizes = [8, 128], strides = [1, 1]} : vector<8x256xf32> to vector<8x128xf32>
    %10 = math.exp %9 : vector<8x128xf32>
    %cst_5 = arith.constant 1.000000e+00 : f32
    %11 = vector.broadcast %cst_5 : f32 to vector<8x128xf32>
    %12 = arith.addf %11, %10 : vector<8x128xf32>
    %13 = tpu.reciprocal %12 : vector<8x128xf32> -> vector<8x128xf32>
    %c0_6 = arith.constant 0 : index
    %c0_7 = arith.constant 0 : index
    %14 = vector.load %arg5[%c0_6, %c0_7] : memref<8x128xf32, #tpu.memory_space<vmem>>, vector<8x128xf32>
    %cst_8 = arith.constant 0.000000e+00 : f32
    %15 = vector.broadcast %cst_8 : f32 to vector<8x128xf32>
    %16 = arith.subf %15, %14 : vector<8x128xf32>
    %17 = math.exp %16 : vector<8x128xf32>
    %18 = arith.addf %17, %13 : vector<8x128xf32>
    %19 = tpu.reciprocal %18 : vector<8x128xf32> -> vector<8x128xf32>
    %c0_9 = arith.constant 0 : index
    %c0_10 = arith.constant 0 : index
    %20 = vector.load %arg4[%c0_9, %c0_10] : memref<8x128xf32, #tpu.memory_space<vmem>>, vector<8x128xf32>
    %21 = arith.mulf %20, %17 : vector<8x128xf32>
    %22 = arith.mulf %8, %13 : vector<8x128xf32>
    %23 = arith.addf %21, %22 : vector<8x128xf32>
    %24 = arith.mulf %23, %19 : vector<8x128xf32>
    %cst_11 = arith.constant 9.99999993E-9 : f32
    %25 = vector.broadcast %cst_11 : f32 to vector<8x128xf32>
    %26 = arith.addf %19, %25 : vector<8x128xf32>
    %27 = math.log %26 : vector<8x128xf32>
    %28 = math.sqrt %26 : vector<8x128xf32>
    %c0_12 = arith.constant 0 : index
    %c0_13 = arith.constant 0 : index
    %29 = vector.load %arg6[%c0_12, %c0_13] : memref<8x128xf32, #tpu.memory_space<vmem>>, vector<8x128xf32>
    %30 = arith.mulf %28, %29 : vector<8x128xf32>
    %31 = arith.addf %24, %30 : vector<8x128xf32>
    %c0_14 = arith.constant 0 : index
    %c0_15 = arith.constant 0 : index
    %32 = vector.load %arg7[%c0_14, %c0_15] : memref<8x128xf32, #tpu.memory_space<vmem>>, vector<8x128xf32>
    tpu.vector_store %arg7[%c0_14, %c0_15], %31 {strides = array<i32>} : memref<8x128xf32, #tpu.memory_space<vmem>>, vector<8x128xf32>,
    %c0_16 = arith.constant 0 : index
    %c0_17 = arith.constant 0 : index
    %33 = vector.load %arg8[%c0_16, %c0_17] : memref<8x128xf32, #tpu.memory_space<vmem>>, vector<8x128xf32>
    tpu.vector_store %arg8[%c0_16, %c0_17], %24 {strides = array<i32>} : memref<8x128xf32, #tpu.memory_space<vmem>>, vector<8x128xf32>,
    %c0_18 = arith.constant 0 : index
    %c0_19 = arith.constant 0 : index
    %34 = vector.load %arg9[%c0_18, %c0_19] : memref<8x128xf32, #tpu.memory_space<vmem>>, vector<8x128xf32>
    tpu.vector_store %arg9[%c0_18, %c0_19], %27 {strides = array<i32>} : memref<8x128xf32, #tpu.memory_space<vmem>>, vector<8x128xf32>,
    return
  }
  func.func @transform_0(%arg0: i32) -> (i32, i32) {
    %c0_i32 = arith.constant 0 : i32
    %c0_i32_0 = arith.constant 0 : i32
    return %arg0, %c0_i32 : i32, i32
  }
  func.func @transform_1(%arg0: i32) -> (i32, i32) {
    %c0_i32 = arith.constant 0 : i32
    %c0_i32_0 = arith.constant 0 : i32
    %c0_i32_1 = arith.constant 0 : i32
    return %c0_i32, %c0_i32_0 : i32, i32
  }
  func.func @transform_2(%arg0: i32) -> (i32, i32) {
    %c0_i32 = arith.constant 0 : i32
    %c0_i32_0 = arith.constant 0 : i32
    %c0_i32_1 = arith.constant 0 : i32
    return %c0_i32, %c0_i32_0 : i32, i32
  }
  func.func @transform_3(%arg0: i32) -> (i32, i32) {
    %c0_i32 = arith.constant 0 : i32
    %c0_i32_0 = arith.constant 0 : i32
    return %arg0, %c0_i32 : i32, i32
  }
  func.func @transform_4(%arg0: i32) -> (i32, i32) {
    %c0_i32 = arith.constant 0 : i32
    %c0_i32_0 = arith.constant 0 : i32
    return %arg0, %c0_i32 : i32, i32
  }
  func.func @transform_5(%arg0: i32) -> (i32, i32) {
    %c0_i32 = arith.constant 0 : i32
    %c0_i32_0 = arith.constant 0 : i32
    return %arg0, %c0_i32 : i32, i32
  }
  func.func @transform_6(%arg0: i32) -> (i32, i32) {
    %c0_i32 = arith.constant 0 : i32
    %c0_i32_0 = arith.constant 0 : i32
    return %arg0, %c0_i32 : i32, i32
  }
  func.func @transform_7(%arg0: i32) -> (i32, i32) {
    %c0_i32 = arith.constant 0 : i32
    %c0_i32_0 = arith.constant 0 : i32
    return %arg0, %c0_i32 : i32, i32
  }
  func.func @transform_8(%arg0: i32) -> (i32, i32) {
    %c0_i32 = arith.constant 0 : i32
    %c0_i32_0 = arith.constant 0 : i32
    return %arg0, %c0_i32 : i32, i32
  }
}

</mosaic_0001>

<llo_original>
// kernel: gaussian_merge.1
$region0: #{gaussian_merge.1}
  #allocation0 [shape = 'u32[]', space=smem, size = 0x4, offset = 0x4, fixed_abs, tag = 'smem constant byte address 0x4 - core index']
  #allocation1 [shape = 'u32[72,128]{1,0:T(1,128)}', space=vmem, size = 0x9000, scoped, tag = 'internal scratch']
  %s0 = inlined_call_operand.vmem [shape: f32[8,32], index: 0, kind: input, shape index: {}]
  %s1 = inlined_call_operand.vmem [shape: f32[32,256], index: 1, kind: input, shape index: {}]
  %s2 = inlined_call_operand.vmem [shape: f32[1,256], index: 2, kind: input, shape index: {}]
  %s3 = inlined_call_operand.vmem [shape: f32[8,128], index: 3, kind: input, shape index: {}]
  %s4 = inlined_call_operand.vmem [shape: f32[8,128], index: 4, kind: input, shape index: {}]
  %s5 = inlined_call_operand.vmem [shape: f32[8,128], index: 5, kind: input, shape index: {}]
  %s6 = inlined_call_operand.hbm [shape: f32[8,128], index: 6, kind: output, shape index: {0}]
  %s7 = inlined_call_operand.hbm [shape: f32[8,128], index: 7, kind: output, shape index: {1}]
  %s8 = inlined_call_operand.hbm [shape: f32[8,128], index: 8, kind: output, shape index: {2}]
  %9 = xla_tuple %s6, %s7, %s8
  %s10 = sld [smem:[#allocation0]]
  $region50: #{gaussian_merge.1} parent=0
    _
  %s12 = ssub.s32 1, %s10
  %s13 = scalar_select 0, %s12, %s10
  $region1: #{gaussian_merge.1} parent=0
    #allocation2 [shape = 'u8[4096]{0}', space=vmem, size = 0x1000, scoped, tag = 'output window, operand 0, single buffered']
    #allocation3 [shape = 's32[1]{0}', space=sflag, size = 0x4, scoped, tag = 'scoped memory for gaussian_merge.1']
    #allocation4 [shape = 'u8[4096]{0}', space=vmem, size = 0x1000, scoped, tag = 'output window, operand 1, single buffered']
    #allocation5 [shape = 's32[1]{0}', space=sflag, size = 0x4, scoped, tag = 'scoped memory for gaussian_merge.1']
    #allocation6 [shape = 'u8[4096]{0}', space=vmem, size = 0x1000, scoped, tag = 'output window, operand 2, single buffered']
    %14 = vsyncpa [#allocation3], 0
    %15 = vsyncpa [#allocation5], 0
    // Predicated region
    $region2: #{gaussian_merge.1} parent=1 // pred_check
      _
    $region3: #{gaussian_merge.1} parent=1 // pred_check_branch
      %17 = sbr.rel (0) target = $region5
    $region4: #{gaussian_merge.1} parent=1 // pred_region
      _
    $region5: #{gaussian_merge.1} parent=1 // pred_fallthru
      _
    // Predicated region
    $region6: #{gaussian_merge.1} parent=1 // pred_check
      _
    $region7: #{gaussian_merge.1} parent=1 // pred_check_branch
      %19 = sbr.rel (0) target = $region9
    $region8: #{gaussian_merge.1} parent=1 // pred_region
      _
    $region9: #{gaussian_merge.1} parent=1 // pred_fallthru
      _
    // Predicated region
    $region10: #{gaussian_merge.1} parent=1 // pred_check
      _
    $region11: #{gaussian_merge.1} parent=1 // pred_check_branch
      %21 = sbr.rel (0) target = $region13
    $region12: #{gaussian_merge.1} parent=1 // pred_region
      _
    $region13: #{gaussian_merge.1} parent=1 // pred_fallthru
      _
    // Predicated region
    $region14: #{gaussian_merge.1} parent=1 // pred_check
      _
    $region15: #{gaussian_merge.1} parent=1 // pred_check_branch
      %23 = sbr.rel (0) target = $region17
    $region16: #{gaussian_merge.1} parent=1 // pred_region
      _
    $region17: #{gaussian_merge.1} parent=1 // pred_fallthru
      _
    // Predicated region
    $region18: #{gaussian_merge.1} parent=1 // pred_check
      _
    $region19: #{gaussian_merge.1} parent=1 // pred_check_branch
      %25 = sbr.rel (0) target = $region21
    $region20: #{gaussian_merge.1} parent=1 // pred_region
      _
    $region21: #{gaussian_merge.1} parent=1 // pred_fallthru
      _
    // Predicated region
    $region22: #{gaussian_merge.1} parent=1 // pred_check
      _
    $region23: #{gaussian_merge.1} parent=1 // pred_check_branch
      %27 = sbr.rel (0) target = $region25
    $region24: #{gaussian_merge.1} parent=1 // pred_region
      _
    $region25: #{gaussian_merge.1} parent=1 // pred_fallthru
      _
    %v29 = vld [vmem:[%s0] sm:$0xff]
    %v30 = vpack.c.bf16 %v29, %v29
    %v31 = vld [vmem:[%s1] sm:$0xff]
    %v32 = vld [vmem:[%s1 + $0x8] sm:$0xff]
    %v33 = vld [vmem:[%s1 + $0x10] sm:$0xff]
    %v34 = vld [vmem:[%s1 + $0x18] sm:$0xff]
    %v35 = vld [vmem:[%s1 + $0x20] sm:$0xff]
    %v36 = vld [vmem:[%s1 + $0x28] sm:$0xff]
    %v37 = vld [vmem:[%s1 + $0x30] sm:$0xff]
    %v38 = vld [vmem:[%s1 + $0x38] sm:$0xff]
    %v39 = vpack.c.bf16 %v33, %v31
    %v40 = vpack.c.bf16 %v34, %v32
    %v41 = vpack.c.bf16 %v37, %v35
    %v42 = vpack.c.bf16 %v38, %v36
    %v43 = vld [vmem:[%s2] sm:$0x3]
    %v45 = vperm.slane %v43, 0
    %v46 = vperm.slane %v43, 1
    %vm49 = vcmask 261120
    %v51 = vsel %vm49, %v30, 0
    %53 = vmatpush.bf16.msra.mxu0 0
    %54 = vmatpush.bf16.msra.mxu0 0
    %55 = vmatpush.bf16.msra.mxu0 0
    %56 = vmatpush.bf16.msra.mxu0 0
    %57 = vmatpush.bf16.msra.mxu0 0
    %58 = vmatpush.bf16.msra.mxu0 0
    %59 = vmatpush.bf16.msra.mxu0 %v41
    %60 = vmatpush.bf16.msra.mxu0 %v39
    %61 = vmatmul.bf16.gmra.mxu0 %v51
    %v62 = vpop.f32.mrf.mxu0
    %v63 = vadd.f32 %v45, %v62
    %v64 = vpop.f32.mrf.mxu0
    %65 = vdwg.mxu0
    %66 = vmatpush.bf16.msra.mxu0 0
    %67 = vmatpush.bf16.msra.mxu0 0
    %68 = vmatpush.bf16.msra.mxu0 0
    %69 = vmatpush.bf16.msra.mxu0 0
    %70 = vmatpush.bf16.msra.mxu0 0
    %71 = vmatpush.bf16.msra.mxu0 0
    %72 = vmatpush.bf16.msra.mxu0 %v42
    %73 = vmatpush.bf16.msra.mxu0 %v40
    %74 = vmatmul.bf16.gmra.mxu0 %v51
    %v75 = vpop.f32.mrf.mxu0
    %v76 = vadd.f32 %v46, %v75
    %v77 = vpop.f32.mrf.mxu0
    %78 = vdwg.mxu0
    %v79 = vmul.f32 %v76, 1.442695
    %v80 = vpow.pop %v79
    %v81 = vadd.f32 %v80, 1.0
    %v82 = vrcp.pop %v81
    %v83 = vmul.f32 %v81, %v82
    %v84 = vsub.f32 1.0, %v83
    %v85 = vmul.f32 %v82, %v84
    %v86 = vadd.f32 %v82, %v85
    %vm87 = vweird.f32 %v81
    %vm88 = vweird.f32 %v82
    %vm89 = vmor %vm87, %vm88
    %v90 = vsel %vm89, %v82, %v86
    %v91 = vand.u32 2147483647, %v81
    %vm92 = vcmp.eq.f32.partialorder %v91, 8.507059e+37
    %v93 = vand.u32 %v81, 2147483648
    %v94 = vor.u32 1.1754944e-38, %v93
    %v95 = vsel %vm92, %v94, %v90
    %v96 = vld [vmem:[%s4] sm:$0xff]
    %v97 = vsub.f32 0.0, %v96
    %v98 = vmul.f32 %v97, 1.442695
    %v99 = vpow.pop %v98
    %v100 = vadd.f32 %v99, %v95
    %v101 = vrcp.pop %v100
    %v102 = vmul.f32 %v100, %v101
    %v103 = vsub.f32 1.0, %v102
    %v104 = vmul.f32 %v101, %v103
    %v105 = vadd.f32 %v101, %v104
    %vm106 = vweird.f32 %v100
    %vm107 = vweird.f32 %v101
    %vm108 = vmor %vm106, %vm107
    %v109 = vsel %vm108, %v101, %v105
    %v110 = vand.u32 2147483647, %v100
    %vm111 = vcmp.eq.f32.partialorder %v110, 8.507059e+37
    %v112 = vand.u32 %v100, 2147483648
    %v113 = vor.u32 1.1754944e-38, %v112
    %v114 = vsel %vm111, %v113, %v109
    %v115 = vld [vmem:[%s3] sm:$0xff]
    %v116 = vmul.f32 %v115, %v99
    %v117 = vmul.f32 %v63, %v95
    %v118 = vadd.f32 %v116, %v117
    %v119 = vmul.f32 %v118, %v114
    %v120 = vadd.f32 %v114, 1e-08
    %v121 = vlog2.pop %v120
    %v122 = vmul.f32 %v121, 0.6931472
    %v123 = vrsqrt.pop %v120
    %v124 = vmul.f32 %v123, %v120
    %v125 = vmul.f32 %v124, %v123
    %v126 = vmul.f32 0.5, %v125
    %v127 = vsub.f32 1.5, %v126
    %v128 = vmul.f32 %v123, %v127
    %v129 = vmul.f32 %v120, %v128
    %vm130 = vcmp.eq.f32.partialorder %v120, inf
    %v131 = vsel %vm130, %v120, %v129
    %vm132 = vcmp.eq.f32.partialorder %v120, 0.0
    %v133 = vand.u32 %v120, 2147483648
    %v134 = vsel %vm132, %v133, %v131
    %v135 = vld [vmem:[%s5] sm:$0xff]
    %v136 = vmul.f32 %v134, %v135
    %v137 = vadd.f32 %v119, %v136
    %138 = vst [vmem:[#allocation2] sm:$0xff] %v137
    %139 = vst [vmem:[#allocation4] sm:$0xff] %v119
    %140 = vst [vmem:[#allocation6] sm:$0xff] %v122
    // Predicated region
    $region26: #{gaussian_merge.1} parent=1 // pred_check
      _
    $region27: #{gaussian_merge.1} parent=1 // pred_check_branch
      %142 = sbr.rel (0) target = $region29
    $region28: #{gaussian_merge.1} parent=1 // pred_region
      %144 = vsyncadd [#allocation3], 0
      %s146 = sshll.u32 [#allocation2], 4
      %s147 = int_to_ptr.vmem [resolvable:$true] %s146
      %s148 = sshll.u32 %s6, 4
      %s149 = int_to_ptr.hbm [resolvable:$true] %s148
      %151 = dma.vmem_to_hbm [thread:$0]  %s147, 128, %s149, [#allocation3]
    $region29: #{gaussian_merge.1} parent=1 // pred_fallthru
      _
    // Predicated region
    $region30: #{gaussian_merge.1} parent=1 // pred_check
      _
    $region31: #{gaussian_merge.1} parent=1 // pred_check_branch
      %153 = sbr.rel (0) target = $region33
    $region32: #{gaussian_merge.1} parent=1 // pred_region
      %155 = vsyncadd [#allocation5], 0
      %s157 = sshll.u32 [#allocation4], 4
      %s158 = int_to_ptr.vmem [resolvable:$true] %s157
      %s159 = sshll.u32 %s7, 4
      %s160 = int_to_ptr.hbm [resolvable:$true] %s159
      %162 = dma.vmem_to_hbm [thread:$0]  %s158, 128, %s160, [#allocation5]
    $region33: #{gaussian_merge.1} parent=1 // pred_fallthru
      _
    // Predicated region
    $region34: #{gaussian_merge.1} parent=1 // pred_check
      _
    $region35: #{gaussian_merge.1} parent=1 // pred_check_branch
      %164 = sbr.rel (0) target = $region37
    $region36: #{gaussian_merge.1} parent=1 // pred_region
      %166 = vsyncadd [#allocation5], 0
      %s168 = sshll.u32 [#allocation6], 4
      %s169 = int_to_ptr.vmem [resolvable:$true] %s168
      %s170 = sshll.u32 %s8, 4
      %s171 = int_to_ptr.hbm [resolvable:$true] %s170
      %173 = dma.vmem_to_hbm [thread:$0]  %s169, 128, %s171, [#allocation5]
    $region37: #{gaussian_merge.1} parent=1 // pred_fallthru
      _
    // Predicated region
    $region38: #{gaussian_merge.1} parent=1 // pred_check
      _
    $region39: #{gaussian_merge.1} parent=1 // pred_check_branch
      %175 = sbr.rel (0) target = $region41
    $region40: #{gaussian_merge.1} parent=1 // pred_region
      %177 = dma.done [#allocation3], 128
    $region41: #{gaussian_merge.1} parent=1 // pred_fallthru
      _
    // Predicated region
    $region42: #{gaussian_merge.1} parent=1 // pred_check
      _
    $region43: #{gaussian_merge.1} parent=1 // pred_check_branch
      %179 = sbr.rel (0) target = $region45
    $region44: #{gaussian_merge.1} parent=1 // pred_region
      %181 = dma.done [#allocation5], 128
    $region45: #{gaussian_merge.1} parent=1 // pred_fallthru
      _
    // Predicated region
    $region46: #{gaussian_merge.1} parent=1 // pred_check
      _
    $region47: #{gaussian_merge.1} parent=1 // pred_check_branch
      %183 = sbr.rel (0) target = $region49
    $region48: #{gaussian_merge.1} parent=1 // pred_region
      %185 = dma.done [#allocation5], 128
    $region49: #{gaussian_merge.1} parent=1 // pred_fallthru
      _
    %186 = vsyncpa [#allocation3], 1
    %187 = vsyncpa [#allocation5], 1

</llo_original>
